<compile_context>
chip_gen: v5e
topology: v5e:2x2
jax: 0.10.0
libtpu: 0.0.40
codegen_flags: <defaults>
</compile_context>

<pallas_src>
import jax
import jax.numpy as jnp
from jax.experimental import pallas as pl
from jax.experimental.pallas import tpu as pltpu


def _round_up(x: int, m: int) -> int:
    return ((x + m - 1) // m) * m


def _cdiv(a: int, b: int) -> int:
    return -(-a // b)


def kan_kernel(n_ref, x_ref, w1_ref, b1_ref, w2_ref, b2_ref, out_ref, acc_ref):
    """Per grid step: column-sum of the lane-packed point tile.  Finalize:
    divide by true N, apply (replicated) W1 + b1, then layer2."""
    i = pl.program_id(0)

    @pl.when(i == 0)
    def _init():
        acc_ref[...] = jnp.zeros_like(acc_ref)

    # Hot loop: pure streaming reduction (no MXU work, HBM-bandwidth bound).
    acc_ref[...] += jnp.sum(x_ref[...], axis=0, keepdims=True)

    @pl.when(i == pl.num_programs(0) - 1)
    def _finalize():
        inv_n = 1.0 / n_ref[0].astype(jnp.float32)       # true point count (SMEM scalar)
        agg = acc_ref[...] * inv_n                       # (1, d_lane) packed mean slots
        # layer1 on the mean: (1, d_lane) @ (d_lane, H_pad) with W1 replicated g
        # times vertically == mean(x) @ W1; bias added after the mean (exact).
        hid = jnp.dot(agg, w1_ref[...], preferred_element_type=jnp.float32) + b1_ref[...]
        # layer2: (1, H_pad) @ (H_pad, D_out_pad) + b2
        out = jnp.dot(hid, w2_ref[...], preferred_element_type=jnp.float32) + b2_ref[...]
        out_ref[...] = out.astype(out_ref.dtype)


def kan_forward(point_set, w1, b1, w2, b2, *, tile_points=16384):
    """point_set: (N, D_in) f32.  w1: (D_in, H), b1: (1, H), w2: (H, D_out),
    b2: (1, D_out).  Returns (D_out,) f32 (the .squeeze(0) of the module)."""
    n, d_in = point_set.shape
    if n < 1:
        raise ValueError("point_set must contain at least one point")
    h_dim = w1.shape[1]
    d_out = w2.shape[1]

    # --- lane-packing factor for the point axis -------------------------------
    if d_in <= 128 and 128 % d_in == 0:
        g = 128 // d_in          # e.g. D_in=16 -> pack 8 points per 128-lane row
    else:
        g = 1
    d_pack = g * d_in
    d_lane = _round_up(d_pack, 128)

    h_pad = _round_up(h_dim, 128)
    o_pad = _round_up(d_out, 128)

    # --- host-side weight prep (zero padding is exact) ------------------------
    w1p = jnp.pad(w1.astype(jnp.float32), ((0, 0), (0, h_pad - h_dim)))     # (D_in, H_pad)
    w1_rep = jnp.tile(w1p, (g, 1))                                          # (g*D_in, H_pad)
    w1_rep = jnp.pad(w1_rep, ((0, d_lane - d_pack), (0, 0)))                # (d_lane, H_pad)
    b1p = jnp.pad(b1.astype(jnp.float32), ((0, 0), (0, h_pad - h_dim)))     # (1, H_pad)
    w2p = jnp.pad(w2.astype(jnp.float32),
                  ((0, h_pad - h_dim), (0, o_pad - d_out)))                 # (H_pad, O_pad)
    b2p = jnp.pad(b2.astype(jnp.float32), ((0, 0), (0, o_pad - d_out)))     # (1, O_pad)

    # --- lane-pack + row-pad the point set (padded slots are zero -> exact) ---
    n_rows = _cdiv(n, g)
    xp = jnp.pad(point_set.astype(jnp.float32), ((0, n_rows * g - n), (0, 0)))
    xp = xp.reshape(n_rows, d_pack)
    if d_lane != d_pack:
        xp = jnp.pad(xp, ((0, 0), (0, d_lane - d_pack)))

    # --- tile the packed-row axis (big tiles to amortize per-step overhead) ---
    tile_rows = max(8, _cdiv(max(tile_points, 1), g))
    tile_rows = min(tile_rows, _round_up(n_rows, 8))
    tile_rows = _round_up(tile_rows, 8)
    n_rows_padded = _round_up(n_rows, tile_rows)
    xp = jnp.pad(xp, ((0, n_rows_padded - n_rows), (0, 0)))
    grid = (n_rows_padded // tile_rows,)

    # True point count as a runtime scalar (avoids recompiling per N).
    n_arr = jnp.asarray([n], dtype=jnp.int32)

    cost = pl.CostEstimate(
        flops=n_rows_padded * d_lane + 2 * d_lane * h_pad + 2 * h_pad * o_pad,
        transcendentals=0,
        bytes_accessed=4 * (xp.size + w1_rep.size + b1p.size + w2p.size + b2p.size + o_pad),
    )

    out = pl.pallas_call(
        kan_kernel,
        out_shape=jax.ShapeDtypeStruct((1, o_pad), jnp.float32),
        grid_spec=pltpu.PrefetchScalarGridSpec(
            num_scalar_prefetch=1,                                   # n_arr -> SMEM
            grid=grid,
            in_specs=[
                pl.BlockSpec((tile_rows, d_lane), lambda i, n: (i, 0)),  # streamed x tiles
                pl.BlockSpec((d_lane, h_pad), lambda i, n: (0, 0)),      # W1 (replicated, resident)
                pl.BlockSpec((1, h_pad), lambda i, n: (0, 0)),           # b1 (resident)
                pl.BlockSpec((h_pad, o_pad), lambda i, n: (0, 0)),       # W2 (resident)
                pl.BlockSpec((1, o_pad), lambda i, n: (0, 0)),           # b2 (resident)
            ],
            out_specs=pl.BlockSpec((1, o_pad), lambda i, n: (0, 0)),
            scratch_shapes=[pltpu.VMEM((1, d_lane), jnp.float32)],       # running column-sum
        ),
        compiler_params=pltpu.CompilerParams(
            dimension_semantics=("arbitrary",),       # reduction over the point axis
            vmem_limit_bytes=32 * 1024 * 1024,        # safe on v7x's 64 MiB VMEM
        ),
        cost_estimate=cost,
    )(n_arr, xp, w1_rep, b1p, w2p, b2p)

    return out[0, :d_out]  # unpad + .squeeze(0)


def _reference(point_set, w1, b1, w2, b2):
    h = point_set @ w1 + b1                      # layer1
    agg = jnp.mean(h, axis=0, keepdims=True)     # mean(dim=0).unsqueeze(0)
    return (agg @ w2 + b2)[0]                    # layer2(...).squeeze(0)


if __name__ == "__main__":
    # Small shapes consistent with the forward pass: N points, D_in feats.
    N, D_IN, H, D_OUT = 8, 16, 32, 8

    key = jax.random.PRNGKey(0)
    k_x, k_w1, k_b1, k_w2, k_b2, k_x2 = jax.random.split(key, 6)

    point_set = jax.random.normal(k_x, (N, D_IN), dtype=jnp.float32)

    # PyTorch Linear stores (out, in); build (out, in) then transpose to the
    # (in, out) layout the kernel consumes.
    w1 = (jax.random.normal(k_w1, (H, D_IN), dtype=jnp.float32) * 0.1).T   # (D_IN, H)
    b1 = jax.random.normal(k_b1, (1, H), dtype=jnp.float32) * 0.1
    w2 = (jax.random.normal(k_w2, (D_OUT, H), dtype=jnp.float32) * 0.1).T  # (H, D_OUT)
    b2 = jax.random.normal(k_b2, (1, D_OUT), dtype=jnp.float32) * 0.1

    # --- case 1: tiny point set (single grid step, lane packing with padding) ---
    out = jax.block_until_ready(kan_forward(point_set, w1, b1, w2, b2))
    ref = _reference(point_set, w1, b1, w2, b2)
    assert out.shape == (D_OUT,), out.shape
    assert jnp.allclose(out, ref, atol=2e-5, rtol=1e-4), (out, ref)

    # --- case 2: larger, non-multiple point count exercises multi-step grid
    #             accumulation + zero-row packing (tile_points=256 -> 4 steps) ---
    N2 = 1000
    point_set2 = jax.random.normal(k_x2, (N2, D_IN), dtype=jnp.float32)
    out2 = jax.block_until_ready(kan_forward(point_set2, w1, b1, w2, b2, tile_points=256))
    ref2 = _reference(point_set2, w1, b1, w2, b2)
    assert out2.shape == (D_OUT,), out2.shape
    assert jnp.allclose(out2, ref2, atol=2e-5, rtol=1e-4), (out2, ref2)

    print("KERNEL_OK")
</pallas_src>

<mosaic_0001>
module attributes {stable_mosaic.version = 11 : i64} {
  func.func @kan_kernel(%arg0: i32, %arg1: memref<1xi32, #tpu.memory_space<smem>>, %arg2: memref<8x128xf32, #tpu.memory_space<vmem>>, %arg3: memref<128x128xf32, #tpu.memory_space<vmem>>, %arg4: memref<1x128xf32, #tpu.memory_space<vmem>>, %arg5: memref<128x128xf32, #tpu.memory_space<vmem>>, %arg6: memref<1x128xf32, #tpu.memory_space<vmem>>, %arg7: memref<1x128xf32, #tpu.memory_space<vmem>>, %arg8: memref<1x128xf32, #tpu.memory_space<vmem>>) attributes {dimension_semantics = [#tpu.dimension_semantics<arbitrary>], iteration_bounds = array<i64: 1>, scalar_prefetch = 1 : i64, scratch_operands = 1 : i64, tpu.core_type = #tpu.core_type<tc>, window_params = [{transform_indices = @transform_0, window_bounds = array<i64: 8, 128>}, {pipeline_mode = #tpu.pipeline_mode<synchronous>, transform_indices = @transform_1, window_bounds = array<i64: 128, 128>}, {pipeline_mode = #tpu.pipeline_mode<synchronous>, transform_indices = @transform_2, window_bounds = array<i64: 1, 128>}, {pipeline_mode = #tpu.pipeline_mode<synchronous>, transform_indices = @transform_3, window_bounds = array<i64: 128, 128>}, {pipeline_mode = #tpu.pipeline_mode<synchronous>, transform_indices = @transform_4, window_bounds = array<i64: 1, 128>}, {pipeline_mode = #tpu.pipeline_mode<synchronous>, transform_indices = @transform_5, window_bounds = array<i64: 1, 128>}]} {
    %c0_i32 = arith.constant 0 : i32
    %0 = arith.cmpi eq, %arg0, %c0_i32 : i32
    %1 = arith.extui %0 : i1 to i32
    %c0_i32_0 = arith.constant 0 : i32
    %2 = arith.cmpi ne, %1, %c0_i32_0 : i32
    scf.if %2 {
      %cst_8 = arith.constant 0.000000e+00 : f32
      %12 = vector.broadcast %cst_8 : f32 to vector<1x128xf32>
      %c0_9 = arith.constant 0 : index
      %c0_10 = arith.constant 0 : index
      %13 = vector.load %arg8[%c0_9, %c0_10] : memref<1x128xf32, #tpu.memory_space<vmem>>, vector<1x128xf32>
      tpu.vector_store %arg8[%c0_9, %c0_10], %12 {strides = array<i32>} : memref<1x128xf32, #tpu.memory_space<vmem>>, vector<1x128xf32>,
    } else {
    }
    %c0 = arith.constant 0 : index
    %c0_1 = arith.constant 0 : index
    %3 = vector.load %arg8[%c0, %c0_1] : memref<1x128xf32, #tpu.memory_space<vmem>>, vector<1x128xf32>
    %c0_2 = arith.constant 0 : index
    %c0_3 = arith.constant 0 : index
    %4 = vector.load %arg2[%c0_2, %c0_3] : memref<8x128xf32, #tpu.memory_space<vmem>>, vector<8x128xf32>
    %cst = arith.constant dense<0.000000e+00> : vector<128xf32>
    %5 = vector.multi_reduction <add>, %4, %cst [0] : vector<8x128xf32> to vector<128xf32>
    %6 = vector.shape_cast %5 : vector<128xf32> to vector<1x128xf32>
    %7 = arith.addf %3, %6 : vector<1x128xf32>
    %c0_4 = arith.constant 0 : index
    %c0_5 = arith.constant 0 : index
    %8 = vector.load %arg8[%c0_4, %c0_5] : memref<1x128xf32, #tpu.memory_space<vmem>>, vector<1x128xf32>
    tpu.vector_store %arg8[%c0_4, %c0_5], %7 {strides = array<i32>} : memref<1x128xf32, #tpu.memory_space<vmem>>, vector<1x128xf32>,
    %c0_i32_6 = arith.constant 0 : i32
    %9 = arith.cmpi eq, %arg0, %c0_i32_6 : i32
    %10 = arith.extui %9 : i1 to i32
    %c0_i32_7 = arith.constant 0 : i32
    %11 = arith.cmpi ne, %10, %c0_i32_7 : i32
    scf.if %11 {
      %c0_8 = arith.constant 0 : index
      %12 = memref.load %arg1[%c0_8] : memref<1xi32, #tpu.memory_space<smem>>
      %13 = arith.sitofp %12 : i32 to f32
      %cst_9 = arith.constant 1.000000e+00 : f32
      %14 = arith.divf %cst_9, %13 : f32
      %c0_10 = arith.constant 0 : index
      %c0_11 = arith.constant 0 : index
      %15 = vector.load %arg8[%c0_10, %c0_11] : memref<1x128xf32, #tpu.memory_space<vmem>>, vector<1x128xf32>
      %16 = vector.broadcast %14 : f32 to vector<1x128xf32>
      %17 = arith.mulf %15, %16 : vector<1x128xf32>
      %c0_12 = arith.constant 0 : index
      %c0_13 = arith.constant 0 : index
      %18 = vector.load %arg3[%c0_12, %c0_13] : memref<128x128xf32, #tpu.memory_space<vmem>>, vector<128x128xf32>
      %cst_14 = arith.constant dense<0.000000e+00> : vector<1x128xf32>
      %19 = tpu.matmul %17, %18, %cst_14 {dimension_numbers = #tpu.dot_dimension_numbers<[1], [0], [0], [1], [0, 0, 1, 1], [], []>} : vector<1x128xf32>, vector<128x128xf32>, vector<1x128xf32> -> vector<1x128xf32>
      %c0_15 = arith.constant 0 : index
      %c0_16 = arith.constant 0 : index
      %20 = vector.load %arg4[%c0_15, %c0_16] : memref<1x128xf32, #tpu.memory_space<vmem>>, vector<1x128xf32>
      %21 = arith.addf %19, %20 : vector<1x128xf32>
      %c0_17 = arith.constant 0 : index
      %c0_18 = arith.constant 0 : index
      %22 = vector.load %arg5[%c0_17, %c0_18] : memref<128x128xf32, #tpu.memory_space<vmem>>, vector<128x128xf32>
      %cst_19 = arith.constant dense<0.000000e+00> : vector<1x128xf32>
      %23 = tpu.matmul %21, %22, %cst_19 {dimension_numbers = #tpu.dot_dimension_numbers<[1], [0], [0], [1], [0, 0, 1, 1], [], []>} : vector<1x128xf32>, vector<128x128xf32>, vector<1x128xf32> -> vector<1x128xf32>
      %c0_20 = arith.constant 0 : index
      %c0_21 = arith.constant 0 : index
      %24 = vector.load %arg6[%c0_20, %c0_21] : memref<1x128xf32, #tpu.memory_space<vmem>>, vector<1x128xf32>
      %25 = arith.addf %23, %24 : vector<1x128xf32>
      %c0_22 = arith.constant 0 : index
      %c0_23 = arith.constant 0 : index
      %26 = vector.load %arg7[%c0_22, %c0_23] : memref<1x128xf32, #tpu.memory_space<vmem>>, vector<1x128xf32>
      tpu.vector_store %arg7[%c0_22, %c0_23], %25 {strides = array<i32>} : memref<1x128xf32, #tpu.memory_space<vmem>>, vector<1x128xf32>,
    } else {
    }
    return
  }
  func.func @transform_0(%arg0: i32, %arg1: memref<1xi32, #tpu.memory_space<smem>>) -> (i32, i32) {
    %c0_i32 = arith.constant 0 : i32
    %c0_i32_0 = arith.constant 0 : i32
    return %arg0, %c0_i32 : i32, i32
  }
  func.func @transform_1(%arg0: i32, %arg1: memref<1xi32, #tpu.memory_space<smem>>) -> (i32, i32) {
    %c0_i32 = arith.constant 0 : i32
    %c0_i32_0 = arith.constant 0 : i32
    %c0_i32_1 = arith.constant 0 : i32
    return %c0_i32, %c0_i32_0 : i32, i32
  }
  func.func @transform_2(%arg0: i32, %arg1: memref<1xi32, #tpu.memory_space<smem>>) -> (i32, i32) {
    %c0_i32 = arith.constant 0 : i32
    %c0_i32_0 = arith.constant 0 : i32
    %c0_i32_1 = arith.constant 0 : i32
    return %c0_i32, %c0_i32_0 : i32, i32
  }
  func.func @transform_3(%arg0: i32, %arg1: memref<1xi32, #tpu.memory_space<smem>>) -> (i32, i32) {
    %c0_i32 = arith.constant 0 : i32
    %c0_i32_0 = arith.constant 0 : i32
    %c0_i32_1 = arith.constant 0 : i32
    return %c0_i32, %c0_i32_0 : i32, i32
  }
  func.func @transform_4(%arg0: i32, %arg1: memref<1xi32, #tpu.memory_space<smem>>) -> (i32, i32) {
    %c0_i32 = arith.constant 0 : i32
    %c0_i32_0 = arith.constant 0 : i32
    %c0_i32_1 = arith.constant 0 : i32
    return %c0_i32, %c0_i32_0 : i32, i32
  }
  func.func @transform_5(%arg0: i32, %arg1: memref<1xi32, #tpu.memory_space<smem>>) -> (i32, i32) {
    %c0_i32 = arith.constant 0 : i32
    %c0_i32_0 = arith.constant 0 : i32
    %c0_i32_1 = arith.constant 0 : i32
    return %c0_i32, %c0_i32_0 : i32, i32
  }
}

</mosaic_0001>

<llo_original>
// kernel: tpu_custom_call.1
$region0: #{tpu_custom_call.1}
  #allocation0 [shape = 'u32[]', space=smem, size = 0x4, offset = 0x4, fixed_abs, tag = 'smem constant byte address 0x4 - core index']
  #allocation1 [shape = 'u32[72,128]{1,0:T(1,128)}', space=vmem, size = 0x9000, scoped, tag = 'internal scratch']
  #allocation2 [shape = 'f32[1,128]{1,0:T(1,128)}', space=vmem, size = 0x200, scoped, tag = 'scratch operand']
  #allocation3 [shape = 's32[1]{0}', space=sflag, size = 0x4, scoped, tag = 'scoped memory for tpu_custom_call.1']
  #allocation4 [shape = 's32[1]{0:T(128)S(6)}', space=smem, size = 0x200, scoped, tag = 'prefetched SMEM operand 0']
  %s0 = inlined_call_operand.<no memory space> [shape: s32[1], index: 0, kind: input, shape index: {}]
  %s1 = inlined_call_operand.hbm [shape: f32[8,128], index: 1, kind: input, shape index: {}]
  %s2 = inlined_call_operand.hbm [shape: f32[128,128], index: 2, kind: input, shape index: {}]
  %s3 = inlined_call_operand.vmem [shape: f32[1,128], index: 3, kind: input, shape index: {}]
  %s4 = inlined_call_operand.hbm [shape: f32[128,128], index: 4, kind: input, shape index: {}]
  %s5 = inlined_call_operand.vmem [shape: f32[1,128], index: 5, kind: input, shape index: {}]
  %s6 = inlined_call_operand.hbm [shape: f32[1,128], index: 6, kind: output, shape index: {}]
  %s7 = sld [smem:[#allocation0]]
  $region50: #{tpu_custom_call.1} parent=0
    _
  %s9 = ssub.s32 1, %s7
  %s10 = scalar_select 0, %s9, %s7
  %11 = sst [smem:[#allocation4]] %s0
  $region1: #{tpu_custom_call.1} parent=0
    #allocation5 [shape = 'u8[4096]{0}', space=vmem, size = 0x1000, scoped, tag = 'input window, operand 1, single buffered']
    #allocation6 [shape = 's32[1]{0}', space=sflag, size = 0x4, scoped, tag = 'scoped memory for tpu_custom_call.1']
    #allocation7 [shape = 's32[1]{0}', space=sflag, size = 0x4, scoped, tag = 'scoped memory for tpu_custom_call.1']
    #allocation8 [shape = 'u8[65536]{0}', space=vmem, size = 0x10000, scoped, tag = 'input window, operand 2, single buffered']
    #allocation9 [shape = 's32[1]{0}', space=sflag, size = 0x4, scoped, tag = 'scoped memory for tpu_custom_call.1']
    #allocation10 [shape = 'u8[65536]{0}', space=vmem, size = 0x10000, scoped, tag = 'input window, operand 4, single buffered']
    #allocation11 [shape = 'u8[512]{0}', space=vmem, size = 0x400, scoped, tag = 'output window, operand 0, single buffered']
    %12 = vsyncpa [#allocation6], 0
    %13 = vsyncpa [#allocation9], 0
    %14 = vsyncpa [#allocation7], 0
    // Predicated region
    $region2: #{tpu_custom_call.1} parent=1 // pred_check
      _
    $region3: #{tpu_custom_call.1} parent=1 // pred_check_branch
      %16 = sbr.rel (0) target = $region5
    $region4: #{tpu_custom_call.1} parent=1 // pred_region
      %18 = vsyncadd [#allocation6], 0
      %s20 = sshll.u32 %s1, 4
      %s21 = int_to_ptr.hbm [resolvable:$true] %s20
      %s22 = sshll.u32 [#allocation5], 4
      %s23 = int_to_ptr.vmem [resolvable:$true] %s22
      %25 = dma.hbm_to_vmem [thread:$0]  %s21, 128, %s23, [#allocation6]
    $region5: #{tpu_custom_call.1} parent=1 // pred_fallthru
      _
    // Predicated region
    $region6: #{tpu_custom_call.1} parent=1 // pred_check
      _
    $region7: #{tpu_custom_call.1} parent=1 // pred_check_branch
      %27 = sbr.rel (0) target = $region9
    $region8: #{tpu_custom_call.1} parent=1 // pred_region
      %29 = vsyncadd [#allocation9], 0
      %s30 = sshll.u32 %s2, 4
      %s31 = int_to_ptr.hbm [resolvable:$true] %s30
      %s32 = sshll.u32 [#allocation8], 4
      %s33 = int_to_ptr.vmem [resolvable:$true] %s32
      %38 = dma.hbm_to_vmem [thread:$0]  %s31, 2048, %s33, [#allocation9], 128, 128, 8
    $region9: #{tpu_custom_call.1} parent=1 // pred_fallthru
      _
    // Predicated region
    $region10: #{tpu_custom_call.1} parent=1 // pred_check
      _
    $region11: #{tpu_custom_call.1} parent=1 // pred_check_branch
      %40 = sbr.rel (0) target = $region13
    $region12: #{tpu_custom_call.1} parent=1 // pred_region
      _
    $region13: #{tpu_custom_call.1} parent=1 // pred_fallthru
      _
    // Predicated region
    $region14: #{tpu_custom_call.1} parent=1 // pred_check
      _
    $region15: #{tpu_custom_call.1} parent=1 // pred_check_branch
      %42 = sbr.rel (0) target = $region17
    $region16: #{tpu_custom_call.1} parent=1 // pred_region
      %44 = vsyncadd [#allocation9], 0
      %s45 = sshll.u32 %s4, 4
      %s46 = int_to_ptr.hbm [resolvable:$true] %s45
      %s47 = sshll.u32 [#allocation10], 4
      %s48 = int_to_ptr.vmem [resolvable:$true] %s47
      %53 = dma.hbm_to_vmem [thread:$0]  %s46, 2048, %s48, [#allocation9], 128, 128, 8
    $region17: #{tpu_custom_call.1} parent=1 // pred_fallthru
      _
    // Predicated region
    $region18: #{tpu_custom_call.1} parent=1 // pred_check
      _
    $region19: #{tpu_custom_call.1} parent=1 // pred_check_branch
      %55 = sbr.rel (0) target = $region21
    $region20: #{tpu_custom_call.1} parent=1 // pred_region
      _
    $region21: #{tpu_custom_call.1} parent=1 // pred_fallthru
      _
    // Predicated region
    $region22: #{tpu_custom_call.1} parent=1 // pred_check
      _
    $region23: #{tpu_custom_call.1} parent=1 // pred_check_branch
      %57 = sbr.rel (0) target = $region25
    $region24: #{tpu_custom_call.1} parent=1 // pred_region
      %59 = dma.done [#allocation6], 128
    $region25: #{tpu_custom_call.1} parent=1 // pred_fallthru
      _
    // Predicated region
    $region26: #{tpu_custom_call.1} parent=1 // pred_check
      _
    $region27: #{tpu_custom_call.1} parent=1 // pred_check_branch
      %61 = sbr.rel (0) target = $region29
    $region28: #{tpu_custom_call.1} parent=1 // pred_region
      %63 = dma.done [#allocation9], 2048
    $region29: #{tpu_custom_call.1} parent=1 // pred_fallthru
      _
    // Predicated region
    $region30: #{tpu_custom_call.1} parent=1 // pred_check
      _
    $region31: #{tpu_custom_call.1} parent=1 // pred_check_branch
      %65 = sbr.rel (0) target = $region33
    $region32: #{tpu_custom_call.1} parent=1 // pred_region
      %67 = dma.done [#allocation9], 2048
    $region33: #{tpu_custom_call.1} parent=1 // pred_fallthru
      _
    %p68 = scmp.eq.s32.totalorder 0, 0
    // Predicated region
    $region34: #{tpu_custom_call.1} parent=1 // pred_check
      %p69 = pneg %p68
    $region35: #{tpu_custom_call.1} parent=1 // pred_check_branch
      %71 = sbr.rel (%p69) target = $region37
    $region36: #{tpu_custom_call.1} parent=1 // pred_region
      %72 = vst [vmem:[#allocation2] sm:$0x1] 0.0
    $region37: #{tpu_custom_call.1} parent=1 // pred_fallthru
      _
    %v73 = vld [vmem:[#allocation2] sm:$0x1]
    %v74 = vld [vmem:[#allocation5] sm:$0xff]
    %v75 = vrot.slane %v74, 4
    %v76 = vadd.f32 %v74, %v75
    %v77 = vrot.slane %v76, 2
    %v78 = vadd.f32 %v76, %v77
    %v79 = vrot.slane %v78, 1
    %v80 = vadd.f32 %v78, %v79
    %v81 = vadd.f32 %v73, %v80
    %82 = vst [vmem:[#allocation2] sm:$0x1] %v81
    // Predicated region
    $region38: #{tpu_custom_call.1} parent=1 // pred_check
      %p83 = pneg %p68
    $region39: #{tpu_custom_call.1} parent=1 // pred_check_branch
      %85 = sbr.rel (%p83) target = $region41
    $region40: #{tpu_custom_call.1} parent=1 // pred_region
      %s86 = sld [smem:[#allocation4]]
      %s87 = scvt.s32.f32 %s86
      %v88 = vstv %s87
      %v89 = vrcp.pop %v88
      %v90 = vmul.f32 %v88, %v89
      %v91 = vsub.f32 1.0, %v90
      %v92 = vmul.f32 %v89, %v91
      %v93 = vadd.f32 %v89, %v92
      %vm94 = vweird.f32 %v88
      %vm95 = vweird.f32 %v89
      %vm96 = vmor %vm94, %vm95
      %v97 = vsel %vm96, %v89, %v93
      %v98 = vand.u32 2147483647, %v88
      %vm99 = vcmp.eq.f32.partialorder %v98, 8.507059e+37
      %v100 = vand.u32 %v88, 2147483648
      %v101 = vor.u32 1.1754944e-38, %v100
      %v102 = vsel %vm99, %v101, %v97
      %s103 = vtos %v102
      %v104 = vld [vmem:[#allocation2] sm:$0x1]
      %v105 = vstv %s103
      %v106 = vmul.f32 %v104, %v105
      %v107 = vld [vmem:[#allocation8] sm:$0xff]
      %v108 = vld [vmem:[#allocation8 + $0x8] sm:$0xff]
      %v109 = vld [vmem:[#allocation8 + $0x10] sm:$0xff]
      %v110 = vld [vmem:[#allocation8 + $0x18] sm:$0xff]
      %v111 = vld [vmem:[#allocation8 + $0x20] sm:$0xff]
      %v112 = vld [vmem:[#allocation8 + $0x28] sm:$0xff]
      %v113 = vld [vmem:[#allocation8 + $0x30] sm:$0xff]
      %v114 = vld [vmem:[#allocation8 + $0x38] sm:$0xff]
      %v115 = vld [vmem:[#allocation8 + $0x40] sm:$0xff]
      %v116 = vld [vmem:[#allocation8 + $0x48] sm:$0xff]
      %v117 = vld [vmem:[#allocation8 + $0x50] sm:$0xff]
      %v118 = vld [vmem:[#allocation8 + $0x58] sm:$0xff]
      %v119 = vld [vmem:[#allocation8 + $0x60] sm:$0xff]
      %v120 = vld [vmem:[#allocation8 + $0x68] sm:$0xff]
      %v121 = vld [vmem:[#allocation8 + $0x70] sm:$0xff]
      %v122 = vld [vmem:[#allocation8 + $0x78] sm:$0xff]
      %v123 = vld [vmem:[%s3] sm:$0x1]
      %124 = vmatpush.msra.mxu0 %v122
      %125 = vmatpush.msra.mxu0 %v121
      %126 = vmatpush.msra.mxu0 %v120
      %127 = vmatpush.msra.mxu0 %v119
      %128 = vmatpush.msra.mxu0 %v118
      %129 = vmatpush.msra.mxu0 %v117
      %130 = vmatpush.msra.mxu0 %v116
      %131 = vmatpush.msra.mxu0 %v115
      %132 = vmatpush.msra.mxu0 %v114
      %133 = vmatpush.msra.mxu0 %v113
      %134 = vmatpush.msra.mxu0 %v112
      %135 = vmatpush.msra.mxu0 %v111
      %136 = vmatpush.msra.mxu0 %v110
      %137 = vmatpush.msra.mxu0 %v109
      %138 = vmatpush.msra.mxu0 %v108
      %139 = vmatpush.msra.mxu0 %v107
      %140 = vmatmul.f32.gmra.mxu0 %v106
      %v141 = vpop.f32.mrf.mxu0
      %v142 = vadd.f32 %v123, %v141
      %143 = vdwg.mxu0
      %v144 = vld [vmem:[#allocation10] sm:$0xff]
      %v145 = vld [vmem:[#allocation10 + $0x8] sm:$0xff]
      %v146 = vld [vmem:[#allocation10 + $0x10] sm:$0xff]
      %v147 = vld [vmem:[#allocation10 + $0x18] sm:$0xff]
      %v148 = vld [vmem:[#allocation10 + $0x20] sm:$0xff]
      %v149 = vld [vmem:[#allocation10 + $0x28] sm:$0xff]
      %v150 = vld [vmem:[#allocation10 + $0x30] sm:$0xff]
      %v151 = vld [vmem:[#allocation10 + $0x38] sm:$0xff]
      %v152 = vld [vmem:[#allocation10 + $0x40] sm:$0xff]
      %v153 = vld [vmem:[#allocation10 + $0x48] sm:$0xff]
      %v154 = vld [vmem:[#allocation10 + $0x50] sm:$0xff]
      %v155 = vld [vmem:[#allocation10 + $0x58] sm:$0xff]
      %v156 = vld [vmem:[#allocation10 + $0x60] sm:$0xff]
      %v157 = vld [vmem:[#allocation10 + $0x68] sm:$0xff]
      %v158 = vld [vmem:[#allocation10 + $0x70] sm:$0xff]
      %v159 = vld [vmem:[#allocation10 + $0x78] sm:$0xff]
      %v160 = vld [vmem:[%s5] sm:$0x1]
      %161 = vmatpush.msra.mxu0 %v159
      %162 = vmatpush.msra.mxu0 %v158
      %163 = vmatpush.msra.mxu0 %v157
      %164 = vmatpush.msra.mxu0 %v156
      %165 = vmatpush.msra.mxu0 %v155
      %166 = vmatpush.msra.mxu0 %v154
      %167 = vmatpush.msra.mxu0 %v153
      %168 = vmatpush.msra.mxu0 %v152
      %169 = vmatpush.msra.mxu0 %v151
      %170 = vmatpush.msra.mxu0 %v150
      %171 = vmatpush.msra.mxu0 %v149
      %172 = vmatpush.msra.mxu0 %v148
      %173 = vmatpush.msra.mxu0 %v147
      %174 = vmatpush.msra.mxu0 %v146
      %175 = vmatpush.msra.mxu0 %v145
      %176 = vmatpush.msra.mxu0 %v144
      %177 = vmatmul.f32.gmra.mxu0 %v142
      %v178 = vpop.f32.mrf.mxu0
      %v179 = vadd.f32 %v160, %v178
      %180 = vdwg.mxu0
      %181 = vst [vmem:[#allocation11] sm:$0x1] %v179
    $region41: #{tpu_custom_call.1} parent=1 // pred_fallthru
      _
    // Predicated region
    $region42: #{tpu_custom_call.1} parent=1 // pred_check
      _
    $region43: #{tpu_custom_call.1} parent=1 // pred_check_branch
      %183 = sbr.rel (0) target = $region45
    $region44: #{tpu_custom_call.1} parent=1 // pred_region
      %185 = vsyncadd [#allocation7], 0
      %s187 = sshll.u32 [#allocation11], 4
      %s188 = int_to_ptr.vmem [resolvable:$true] %s187
      %s189 = sshll.u32 %s6, 4
      %s190 = int_to_ptr.hbm [resolvable:$true] %s189
      %192 = dma.vmem_to_hbm [thread:$0]  %s188, 16, %s190, [#allocation7]
    $region45: #{tpu_custom_call.1} parent=1 // pred_fallthru
      _
    // Predicated region
    $region46: #{tpu_custom_call.1} parent=1 // pred_check
      _
    $region47: #{tpu_custom_call.1} parent=1 // pred_check_branch
      %194 = sbr.rel (0) target = $region49
    $region48: #{tpu_custom_call.1} parent=1 // pred_region
      %196 = dma.done [#allocation7], 16
    $region49: #{tpu_custom_call.1} parent=1 // pred_fallthru
      _
    %197 = vsyncpa [#allocation6], 1
    %198 = vsyncpa [#allocation9], 1
    %199 = vsyncpa [#allocation7], 1

</llo_original>
